<compile_context>
chip_gen: v5e
topology: v5e:2x2
jax: 0.10.0
libtpu: 0.0.40
codegen_flags: <defaults>
</compile_context>

<pallas_src>
import math

import jax
import jax.numpy as jnp
from jax.experimental import pallas as pl
from jax.experimental.pallas import tpu as pltpu


def _make_kernel(seq_len, feature_dim, head_dim, q_tile, compute_dtype):
    def kernel(x_ref, wqkv_ref, bqkv_ref, wo_ref, bo_ref, o_ref, acc_ref):
        h = pl.program_id(2)

        @pl.when(h == 0)
        def _init():
            acc_ref[...] = jnp.zeros_like(acc_ref)

        x = x_ref[0]             # (S, F)     compute_dtype
        wqkv = wqkv_ref[0]       # (F, 3*hd)  compute_dtype
        bqkv = bqkv_ref[0]       # (1, 3*hd)  f32

        # One packed projection per head; columns are [q | k | v].
        # (The 1/sqrt(hd) scale is already folded into the q columns.)
        qkv = jnp.dot(x, wqkv, preferred_element_type=jnp.float32) + bqkv   # (S, 3hd)

        if q_tile == seq_len:
            q_h = qkv[:, :head_dim]                                         # (tq, hd)
        else:
            row0 = pl.multiple_of(pl.program_id(1) * q_tile, q_tile)
            q_h = jax.lax.dynamic_slice(qkv, (row0, 0), (q_tile, head_dim))
        # These lane slices are free once head_dim is a multiple of 128.
        k_h = qkv[:, head_dim:2 * head_dim]                                 # (S, hd)
        v_h = qkv[:, 2 * head_dim:]                                         # (S, hd)

        # Scores: contract the last dims directly (no k transpose in-kernel).
        s = jax.lax.dot_general(
            q_h.astype(compute_dtype), k_h.astype(compute_dtype),
            (((1,), (1,)), ((), ())),
            preferred_element_type=jnp.float32)                             # (tq, S)

        # Softmax in f32; denominator reciprocal on the EUP.
        s = s - jnp.max(s, axis=-1, keepdims=True)
        p = jnp.exp(s)
        p = p * pl.reciprocal(jnp.sum(p, axis=-1, keepdims=True), approx=True)

        # TODO(synk): for very long S, loop K tiles here with an online-softmax
        # accumulator instead of materializing the full (tq, S) score block.
        ctx = jnp.dot(p.astype(compute_dtype), v_h.astype(compute_dtype),
                      preferred_element_type=jnp.float32)                   # (tq, hd)

        # Fused "concat heads + fc_out": accumulate ctx_h @ Wo[h] into acc.
        acc_ref[...] += jnp.dot(ctx.astype(compute_dtype), wo_ref[0],
                                preferred_element_type=jnp.float32)

        @pl.when(h == pl.num_programs(2) - 1)
        def _finalize():
            o_ref[0] = (acc_ref[...] + bo_ref[...]).astype(o_ref.dtype)

    return kernel


def relational_attention(x, params, num_heads, *, q_block=128,
                         compute_dtype=jnp.float32):
    """x: (B, S, F).  params: nn.Linear-style weights (out,in) and biases (out,).

    At real shapes on v6e/v7x pass compute_dtype=jnp.bfloat16 (MXU inputs);
    softmax math and all accumulation stay f32 inside the kernel.
    """
    B, S, F = x.shape
    hd = F // num_heads
    scale = 1.0 / math.sqrt(hd)

    # nn.Linear does y = x @ W.T + b with W of shape (out, in).  Pre-transpose
    # to (in, out), split the head axis out as a LEADING dim, fold the
    # 1/sqrt(hd) scale into the query columns, and pack [q | k | v] along the
    # output dim so the kernel does ONE projection dot per head.  All of this
    # is free wrapper-side XLA work.
    def heads_leading(w_t):                    # (F, F_out) -> (H, F, hd)
        return w_t.reshape(F, num_heads, hd).transpose(1, 0, 2)

    wqkv = jnp.concatenate(
        [heads_leading(params["wq"].T * scale),
         heads_leading(params["wk"].T),
         heads_leading(params["wv"].T)], axis=-1).astype(compute_dtype)   # (H, F, 3hd)
    bqkv = jnp.concatenate(
        [(params["bq"] * scale).reshape(num_heads, 1, hd),
         params["bk"].reshape(num_heads, 1, hd),
         params["bv"].reshape(num_heads, 1, hd)], axis=-1).astype(jnp.float32)

    wo = params["wo"].T.reshape(num_heads, hd, F).astype(compute_dtype)   # (H, hd, F)
    bo = params["bo"].reshape(1, F).astype(jnp.float32)

    x_in = x.astype(compute_dtype)

    tq = min(S, q_block)            # >=128-row q tiles at real S; full S here
    n_q = pl.cdiv(S, tq)

    # Per-generation scoped-VMEM sizing (~96 MiB on v5e/v6e, ~48 MiB on v7x).
    try:
        vmem_limit = min(int(pltpu.get_tpu_info().vmem_capacity_bytes) * 3 // 4,
                         100 * 1024 * 1024)
    except Exception:
        vmem_limit = 32 * 1024 * 1024

    return pl.pallas_call(
        _make_kernel(S, F, hd, tq, compute_dtype),
        out_shape=jax.ShapeDtypeStruct((B, S, F), x.dtype),
        grid_spec=pltpu.PrefetchScalarGridSpec(
            num_scalar_prefetch=0,
            grid=(B, n_q, num_heads),
            in_specs=[
                # Whole sequence (K/V source); resident across q tiles & heads.
                pl.BlockSpec((1, S, F), lambda b, q, h: (b, 0, 0)),
                # Per-head packed QKV weights / bias and fc_out slice: indexed
                # by the head axis -> only one head resident, next prefetched.
                pl.BlockSpec((1, F, 3 * hd), lambda b, q, h: (h, 0, 0)),
                pl.BlockSpec((1, 1, 3 * hd), lambda b, q, h: (h, 0, 0)),
                pl.BlockSpec((1, hd, F), lambda b, q, h: (h, 0, 0)),
                # fc_out bias: constant index -> single-buffer it.
                pl.BlockSpec((1, F), lambda b, q, h: (0, 0),
                             pipeline_mode=pl.Buffered(1)),
            ],
            out_specs=pl.BlockSpec((1, tq, F), lambda b, q, h: (b, q, 0)),
            scratch_shapes=[pltpu.VMEM((tq, F), jnp.float32)],
        ),
        compiler_params=pltpu.CompilerParams(
            # batch & q tiles are parallel (megacore); head axis is the
            # output-accumulation (reduction) axis.
            dimension_semantics=("parallel", "parallel", "arbitrary"),
            vmem_limit_bytes=vmem_limit,
        ),
    )(x_in, wqkv, bqkv, wo, bo)


def init_params(key, feature_dim):
    """Deterministic init matching nn.Linear shapes: weight (out,in), bias (out,)."""
    ks = jax.random.split(key, 8)
    bound = 1.0 / math.sqrt(feature_dim)

    def u(k, shape):
        return jax.random.uniform(k, shape, jnp.float32, -bound, bound)

    return {
        "wq": u(ks[0], (feature_dim, feature_dim)), "bq": u(ks[1], (feature_dim,)),
        "wk": u(ks[2], (feature_dim, feature_dim)), "bk": u(ks[3], (feature_dim,)),
        "wv": u(ks[4], (feature_dim, feature_dim)), "bv": u(ks[5], (feature_dim,)),
        "wo": u(ks[6], (feature_dim, feature_dim)), "bo": u(ks[7], (feature_dim,)),
    }


def reference_attention(x, params, num_heads):
    """Pure-JAX reference mirroring the PyTorch forward exactly."""
    B, S, F = x.shape
    hd = F // num_heads
    q = x @ params["wq"].T + params["bq"]
    k = x @ params["wk"].T + params["bk"]
    v = x @ params["wv"].T + params["bv"]
    q = q.reshape(B, S, num_heads, hd).transpose(0, 2, 1, 3)
    k = k.reshape(B, S, num_heads, hd).transpose(0, 2, 1, 3)
    v = v.reshape(B, S, num_heads, hd).transpose(0, 2, 1, 3)
    scores = jnp.einsum("bhqd,bhkd->bhqk", q, k) / math.sqrt(hd)
    attn = jax.nn.softmax(scores, axis=-1)
    out = jnp.einsum("bhqk,bhkd->bhqd", attn, v)
    out = out.transpose(0, 2, 1, 3).reshape(B, S, F)
    return out @ params["wo"].T + params["bo"]


if __name__ == "__main__":
    key = jax.random.PRNGKey(0)
    k_x, k_p = jax.random.split(key)

    batch, seq, feature_dim, num_heads = 2, 8, 32, 4
    x = jax.random.normal(k_x, (batch, seq, feature_dim), jnp.float32)
    params = init_params(k_p, feature_dim)

    out = relational_attention(x, params, num_heads)
    out = jax.block_until_ready(out)

    ref = reference_attention(x, params, num_heads)
    # Tolerance slightly looser than 1e-4 because the softmax denominator uses
    # the approximate EUP reciprocal (per the perf review).
    assert jnp.allclose(out, ref, atol=2e-3, rtol=2e-3), "mismatch vs reference"

    print("KERNEL_OK")
</pallas_src>

<mosaic_0001>
module attributes {stable_mosaic.version = 11 : i64} {
  func.func @kernel(%arg0: i32, %arg1: i32, %arg2: i32, %arg3: memref<1x8x32xf32, #tpu.memory_space<vmem>>, %arg4: memref<1x32x24xf32, #tpu.memory_space<vmem>>, %arg5: memref<1x1x24xf32, #tpu.memory_space<vmem>>, %arg6: memref<1x8x32xf32, #tpu.memory_space<vmem>>, %arg7: memref<1x32xf32, #tpu.memory_space<vmem>>, %arg8: memref<1x8x32xf32, #tpu.memory_space<vmem>>, %arg9: memref<8x32xf32, #tpu.memory_space<vmem>>) attributes {dimension_semantics = [#tpu.dimension_semantics<parallel>, #tpu.dimension_semantics<parallel>, #tpu.dimension_semantics<arbitrary>], iteration_bounds = array<i64: 2, 1, 4>, scalar_prefetch = 0 : i64, scratch_operands = 1 : i64, tpu.core_type = #tpu.core_type<tc>, window_params = [{transform_indices = @transform_0, window_bounds = array<i64: 1, 8, 32>}, {transform_indices = @transform_1, window_bounds = array<i64: 1, 32, 24>}, {transform_indices = @transform_2, window_bounds = array<i64: 1, 1, 24>}, {transform_indices = @transform_3, window_bounds = array<i64: 1, 8, 32>}, {pipeline_mode = #tpu.pipeline_mode<synchronous>, transform_indices = @transform_4, window_bounds = array<i64: 1, 32>}, {transform_indices = @transform_5, window_bounds = array<i64: 1, 8, 32>}]} {
    %c0_i32 = arith.constant 0 : i32
    %0 = arith.cmpi eq, %arg2, %c0_i32 : i32
    %1 = arith.extui %0 : i1 to i32
    %c0_i32_0 = arith.constant 0 : i32
    %2 = arith.cmpi ne, %1, %c0_i32_0 : i32
    scf.if %2 {
      %cst_22 = arith.constant 0.000000e+00 : f32
      %36 = vector.broadcast %cst_22 : f32 to vector<8x32xf32>
      %c0_23 = arith.constant 0 : index
      %c0_24 = arith.constant 0 : index
      %37 = vector.load %arg9[%c0_23, %c0_24] : memref<8x32xf32, #tpu.memory_space<vmem>>, vector<8x32xf32>
      tpu.vector_store %arg9[%c0_23, %c0_24], %36 {strides = array<i32>} : memref<8x32xf32, #tpu.memory_space<vmem>>, vector<8x32xf32>,
    } else {
    }
    %c0 = arith.constant 0 : index
    %c0_1 = arith.constant 0 : index
    %c0_2 = arith.constant 0 : index
    %3 = vector.load %arg3[%c0, %c0_1, %c0_2] : memref<1x8x32xf32, #tpu.memory_space<vmem>>, vector<1x8x32xf32>
    %4 = vector.shape_cast %3 : vector<1x8x32xf32> to vector<8x32xf32>
    %c0_3 = arith.constant 0 : index
    %c0_4 = arith.constant 0 : index
    %c0_5 = arith.constant 0 : index
    %5 = vector.load %arg4[%c0_3, %c0_4, %c0_5] : memref<1x32x24xf32, #tpu.memory_space<vmem>>, vector<1x32x24xf32>
    %6 = vector.shape_cast %5 : vector<1x32x24xf32> to vector<32x24xf32>
    %c0_6 = arith.constant 0 : index
    %c0_7 = arith.constant 0 : index
    %c0_8 = arith.constant 0 : index
    %7 = vector.load %arg5[%c0_6, %c0_7, %c0_8] : memref<1x1x24xf32, #tpu.memory_space<vmem>>, vector<1x1x24xf32>
    %8 = vector.shape_cast %7 : vector<1x1x24xf32> to vector<1x24xf32>
    %cst = arith.constant dense<0.000000e+00> : vector<8x24xf32>
    %9 = tpu.matmul %4, %6, %cst {dimension_numbers = #tpu.dot_dimension_numbers<[1], [0], [0], [1], [0, 0, 1, 1], [], []>} : vector<8x32xf32>, vector<32x24xf32>, vector<8x24xf32> -> vector<8x24xf32>
    %10 = vector.broadcast %8 : vector<1x24xf32> to vector<8x24xf32>
    %11 = arith.addf %9, %10 : vector<8x24xf32>
    %12 = vector.extract_strided_slice %11 {offsets = [0, 0], sizes = [8, 8], strides = [1, 1]} : vector<8x24xf32> to vector<8x8xf32>
    %13 = vector.extract_strided_slice %11 {offsets = [0, 8], sizes = [8, 8], strides = [1, 1]} : vector<8x24xf32> to vector<8x8xf32>
    %14 = vector.extract_strided_slice %11 {offsets = [0, 16], sizes = [8, 8], strides = [1, 1]} : vector<8x24xf32> to vector<8x8xf32>
    %cst_9 = arith.constant dense<0.000000e+00> : vector<8x8xf32>
    %15 = tpu.matmul %12, %13, %cst_9 {dimension_numbers = #tpu.dot_dimension_numbers<[1], [1], [0], [0], [0, 0, 1, 0], [], []>} : vector<8x8xf32>, vector<8x8xf32>, vector<8x8xf32> -> vector<8x8xf32>
    %cst_10 = arith.constant dense<0xFF800000> : vector<8xf32>
    %16 = vector.multi_reduction <maximumf>, %15, %cst_10 [1] : vector<8x8xf32> to vector<8xf32>
    %17 = vector.shape_cast %16 : vector<8xf32> to vector<8x1xf32>
    %18 = vector.broadcast %17 : vector<8x1xf32> to vector<8x8xf32>
    %19 = arith.subf %15, %18 : vector<8x8xf32>
    %20 = math.exp %19 : vector<8x8xf32>
    %cst_11 = arith.constant dense<0.000000e+00> : vector<8xf32>
    %21 = vector.multi_reduction <add>, %20, %cst_11 [1] : vector<8x8xf32> to vector<8xf32>
    %22 = vector.shape_cast %21 : vector<8xf32> to vector<8x1xf32>
    %23 = tpu.reciprocal %22 {approx = true} : vector<8x1xf32> -> vector<8x1xf32>
    %24 = vector.broadcast %23 : vector<8x1xf32> to vector<8x8xf32>
    %25 = arith.mulf %20, %24 : vector<8x8xf32>
    %cst_12 = arith.constant dense<0.000000e+00> : vector<8x8xf32>
    %26 = tpu.matmul %25, %14, %cst_12 {dimension_numbers = #tpu.dot_dimension_numbers<[1], [0], [0], [1], [0, 0, 1, 1], [], []>} : vector<8x8xf32>, vector<8x8xf32>, vector<8x8xf32> -> vector<8x8xf32>
    %c0_13 = arith.constant 0 : index
    %c0_14 = arith.constant 0 : index
    %27 = vector.load %arg9[%c0_13, %c0_14] : memref<8x32xf32, #tpu.memory_space<vmem>>, vector<8x32xf32>
    %c0_15 = arith.constant 0 : index
    %c0_16 = arith.constant 0 : index
    %c0_17 = arith.constant 0 : index
    %28 = vector.load %arg6[%c0_15, %c0_16, %c0_17] : memref<1x8x32xf32, #tpu.memory_space<vmem>>, vector<1x8x32xf32>
    %29 = vector.shape_cast %28 : vector<1x8x32xf32> to vector<8x32xf32>
    %cst_18 = arith.constant dense<0.000000e+00> : vector<8x32xf32>
    %30 = tpu.matmul %26, %29, %cst_18 {dimension_numbers = #tpu.dot_dimension_numbers<[1], [0], [0], [1], [0, 0, 1, 1], [], []>} : vector<8x8xf32>, vector<8x32xf32>, vector<8x32xf32> -> vector<8x32xf32>
    %31 = arith.addf %27, %30 : vector<8x32xf32>
    %c0_19 = arith.constant 0 : index
    %c0_20 = arith.constant 0 : index
    %32 = vector.load %arg9[%c0_19, %c0_20] : memref<8x32xf32, #tpu.memory_space<vmem>>, vector<8x32xf32>
    tpu.vector_store %arg9[%c0_19, %c0_20], %31 {strides = array<i32>} : memref<8x32xf32, #tpu.memory_space<vmem>>, vector<8x32xf32>,
    %c3_i32 = arith.constant 3 : i32
    %33 = arith.cmpi eq, %arg2, %c3_i32 : i32
    %34 = arith.extui %33 : i1 to i32
    %c0_i32_21 = arith.constant 0 : i32
    %35 = arith.cmpi ne, %34, %c0_i32_21 : i32
    scf.if %35 {
      %c0_22 = arith.constant 0 : index
      %c0_23 = arith.constant 0 : index
      %36 = vector.load %arg9[%c0_22, %c0_23] : memref<8x32xf32, #tpu.memory_space<vmem>>, vector<8x32xf32>
      %c0_24 = arith.constant 0 : index
      %c0_25 = arith.constant 0 : index
      %37 = vector.load %arg7[%c0_24, %c0_25] : memref<1x32xf32, #tpu.memory_space<vmem>>, vector<1x32xf32>
      %38 = vector.broadcast %37 : vector<1x32xf32> to vector<8x32xf32>
      %39 = arith.addf %36, %38 : vector<8x32xf32>
      %c0_26 = arith.constant 0 : index
      %c0_27 = arith.constant 0 : index
      %c0_28 = arith.constant 0 : index
      %40 = vector.load %arg8[%c0_26, %c0_27, %c0_28] : memref<1x8x32xf32, #tpu.memory_space<vmem>>, vector<1x8x32xf32>
      %41 = vector.shape_cast %40 : vector<1x8x32xf32> to vector<8x32xf32>
      %42 = vector.shape_cast %39 : vector<8x32xf32> to vector<1x8x32xf32>
      tpu.vector_store %arg8[%c0_26, %c0_27, %c0_28], %42 {strides = array<i32>} : memref<1x8x32xf32, #tpu.memory_space<vmem>>, vector<1x8x32xf32>,
    } else {
    }
    return
  }
  func.func @transform_0(%arg0: i32, %arg1: i32, %arg2: i32) -> (i32, i32, i32) {
    %c0_i32 = arith.constant 0 : i32
    %c0_i32_0 = arith.constant 0 : i32
    %c0_i32_1 = arith.constant 0 : i32
    return %arg0, %c0_i32, %c0_i32_0 : i32, i32, i32
  }
  func.func @transform_1(%arg0: i32, %arg1: i32, %arg2: i32) -> (i32, i32, i32) {
    %c0_i32 = arith.constant 0 : i32
    %c0_i32_0 = arith.constant 0 : i32
    %c0_i32_1 = arith.constant 0 : i32
    return %arg2, %c0_i32, %c0_i32_0 : i32, i32, i32
  }
  func.func @transform_2(%arg0: i32, %arg1: i32, %arg2: i32) -> (i32, i32, i32) {
    %c0_i32 = arith.constant 0 : i32
    %c0_i32_0 = arith.constant 0 : i32
    %c0_i32_1 = arith.constant 0 : i32
    return %arg2, %c0_i32, %c0_i32_0 : i32, i32, i32
  }
  func.func @transform_3(%arg0: i32, %arg1: i32, %arg2: i32) -> (i32, i32, i32) {
    %c0_i32 = arith.constant 0 : i32
    %c0_i32_0 = arith.constant 0 : i32
    %c0_i32_1 = arith.constant 0 : i32
    return %arg2, %c0_i32, %c0_i32_0 : i32, i32, i32
  }
  func.func @transform_4(%arg0: i32, %arg1: i32, %arg2: i32) -> (i32, i32) {
    %c0_i32 = arith.constant 0 : i32
    %c0_i32_0 = arith.constant 0 : i32
    %c0_i32_1 = arith.constant 0 : i32
    return %c0_i32, %c0_i32_0 : i32, i32
  }
  func.func @transform_5(%arg0: i32, %arg1: i32, %arg2: i32) -> (i32, i32, i32) {
    %c0_i32 = arith.constant 0 : i32
    %c0_i32_0 = arith.constant 0 : i32
    return %arg0, %arg1, %c0_i32 : i32, i32, i32
  }
}

</mosaic_0001>

<llo_original>
// kernel: tpu_custom_call.1
$region0: #{tpu_custom_call.1}
  #allocation0 [shape = 'u32[]', space=smem, size = 0x4, offset = 0x4, fixed_abs, tag = 'smem constant byte address 0x4 - core index']
  #allocation1 [shape = 'u32[72,128]{1,0:T(1,128)}', space=vmem, size = 0x9000, scoped, tag = 'internal scratch']
  #allocation2 [shape = 'f32[8,32]{1,0:T(8,128)}', space=vmem, size = 0x1000, scoped, tag = 'scratch operand']
  %s0 = inlined_call_operand.vmem [shape: f32[2,8,32], index: 0, kind: input, shape index: {}]
  %s1 = inlined_call_operand.vmem [shape: f32[4,32,24], index: 1, kind: input, shape index: {}]
  %s2 = inlined_call_operand.vmem [shape: f32[4,1,24], index: 2, kind: input, shape index: {}]
  %s3 = inlined_call_operand.vmem [shape: f32[4,8,32], index: 3, kind: input, shape index: {}]
  %s4 = inlined_call_operand.vmem [shape: f32[1,32], index: 4, kind: input, shape index: {}]
  %s5 = inlined_call_operand.hbm [shape: f32[2,8,32], index: 5, kind: output, shape index: {}]
  %s6 = sld [smem:[#allocation0]]
  $region61: #{tpu_custom_call.1} parent=0
    _
  %s8 = ssub.s32 1, %s6
  %s9 = scalar_select 0, %s8, %s6
  $region1: #{tpu_custom_call.1} parent=0
    #allocation3 [shape = 'u8[8192]{0}', space=vmem, size = 0x2000, scoped, tag = 'output window, operand 0']
    #allocation4 [shape = 's32[2]{0}', space=sflag, size = 0x8, scoped, tag = 'scoped memory for tpu_custom_call.1']
    %10 = vsyncpa [#allocation4], 0
    %s11 = scalar_lea.sflag [#allocation4], 1
    %12 = vsyncpa %s11, 0
    loop: start=0, step=1, limit=10
    $region2: #{tpu_custom_call.1} parent=1 // loop_pre_header
      _
    $region3: #{tpu_custom_call.1} parent=1 // loop_header
      %s14 = sphi 0, %s18
      %p15 = scmp.ge.s32.totalorder %s14, 10
      %s21 = sphi 0, %s40
      %s22 = sphi 0, %s36
      %s23 = sphi 0, %s32
      %s24 = sphi 0, %s21
      %s25 = sphi 0, %s22
      %s26 = sphi 0, %s23
      %s27 = sphi 0, %s24
      %s28 = sphi 0, %s25
      %s29 = sphi 0, %s26
      %s43 = sphi 0, %s45
      %s46 = sphi 0, %s43
      %s47 = sphi 0, %s46
      %s63 = sphi 0, %s47
      %s69 = sphi 0, %s71
      %s72 = sphi 0, %s69
      %s73 = sphi 0, %s72
      %s89 = sphi 0, %s73
      %s95 = sphi 0, %s97
      %s98 = sphi 0, %s95
      %s99 = sphi 0, %s98
      %s115 = sphi 0, %s99
      %s121 = sphi 0, %s123
      %s124 = sphi 0, %s121
      %s125 = sphi 0, %s124
      %s141 = sphi 0, %s125
      %s145 = sphi 0, %s145
      %s147 = sphi 0, %s145
      %s148 = sphi 0, %s147
      %s162 = sphi 0, %s148
      %s170 = sphi 0, %s172
      %s173 = sphi 0, %s170
      %s174 = sphi 0, %s173
      %s190 = sphi 0, %s174
    $region4: #{tpu_custom_call.1} parent=1 // loop_header_branch
      %17 = sbr.rel (%p15) target = $region8
    $region5: #{tpu_custom_call.1} parent=1 // loop_body
      %s19 = ssub.s32 %s14, 1
      %s20 = ssub.s32 %s14, 2
      %s30 = sadd.s32 1, %s23
      %p31 = scmp.ge.s32.totalorder %s30, 4
      %s32 = scalar_select %p31, 0, %s30
      %s33 = sadd.s32 1, %s22
      %s34 = scalar_select %p31, %s33, %s22
      %p35 = scmp.ge.s32.totalorder %s34, 1
      %s36 = scalar_select %p35, 0, %s34
      %s37 = sadd.s32 1, %s21
      %s38 = scalar_select %p35, %s37, %s21
      %p39 = scmp.ge.s32.totalorder %s38, 2
      %s40 = scalar_select %p39, 0, %s38
      %s41 = ssub.s32 %s21, %s40
      %p42 = scmp.eq.s32.totalorder %s41, 0
      %s44 = sadd.s32 %s43, 1
      %s45 = scalar_select %p42, %s43, %s44
      %p48 = pneg %p42
      %p49 = scmp.eq.s32.totalorder %s14, 7
      %p50 = por %p48, %p49
      %p51 = scmp.ne.s32.totalorder %s43, %s46
      %p52 = scmp.eq.s32.totalorder %s14, 0
      %p53 = por %p51, %p52
      %p54 = scmp.ne.s32.totalorder %s43, %s46
      %p55 = scmp.eq.s32.totalorder %s19, 7
      %p56 = por %p54, %p55
      %p57 = scmp.ne.s32.totalorder %s46, %s47
      %p58 = scmp.eq.s32.totalorder %s19, 0
      %p59 = por %p57, %p58
      %p60 = scmp.ne.s32.totalorder %s46, %s47
      %p61 = scmp.eq.s32.totalorder %s20, 7
      %p62 = por %p60, %p61
      %p64 = scmp.ne.s32.totalorder %s47, %s63
      %p65 = scmp.eq.s32.totalorder %s20, 0
      %p66 = por %p64, %p65
      %s67 = ssub.s32 %s23, %s32
      %p68 = scmp.eq.s32.totalorder %s67, 0
      %s70 = sadd.s32 %s69, 1
      %s71 = scalar_select %p68, %s69, %s70
      %p74 = pneg %p68
      %p75 = scmp.eq.s32.totalorder %s14, 7
      %p76 = por %p74, %p75
      %p77 = scmp.ne.s32.totalorder %s69, %s72
      %p78 = scmp.eq.s32.totalorder %s14, 0
      %p79 = por %p77, %p78
      %p80 = scmp.ne.s32.totalorder %s69, %s72
      %p81 = scmp.eq.s32.totalorder %s19, 7
      %p82 = por %p80, %p81
      %p83 = scmp.ne.s32.totalorder %s72, %s73
      %p84 = scmp.eq.s32.totalorder %s19, 0
      %p85 = por %p83, %p84
      %p86 = scmp.ne.s32.totalorder %s72, %s73
      %p87 = scmp.eq.s32.totalorder %s20, 7
      %p88 = por %p86, %p87
      %p90 = scmp.ne.s32.totalorder %s73, %s89
      %p91 = scmp.eq.s32.totalorder %s20, 0
      %p92 = por %p90, %p91
      %s93 = ssub.s32 %s23, %s32
      %p94 = scmp.eq.s32.totalorder %s93, 0
      %s96 = sadd.s32 %s95, 1
      %s97 = scalar_select %p94, %s95, %s96
      %p100 = pneg %p94
      %p101 = scmp.eq.s32.totalorder %s14, 7
      %p102 = por %p100, %p101
      %p103 = scmp.ne.s32.totalorder %s95, %s98
      %p104 = scmp.eq.s32.totalorder %s14, 0
      %p105 = por %p103, %p104
      %p106 = scmp.ne.s32.totalorder %s95, %s98
      %p107 = scmp.eq.s32.totalorder %s19, 7
      %p108 = por %p106, %p107
      %p109 = scmp.ne.s32.totalorder %s98, %s99
      %p110 = scmp.eq.s32.totalorder %s19, 0
      %p111 = por %p109, %p110
      %p112 = scmp.ne.s32.totalorder %s98, %s99
      %p113 = scmp.eq.s32.totalorder %s20, 7
      %p114 = por %p112, %p113
      %p116 = scmp.ne.s32.totalorder %s99, %s115
      %p117 = scmp.eq.s32.totalorder %s20, 0
      %p118 = por %p116, %p117
      %s119 = ssub.s32 %s23, %s32
      %p120 = scmp.eq.s32.totalorder %s119, 0
      %s122 = sadd.s32 %s121, 1
      %s123 = scalar_select %p120, %s121, %s122
      %p126 = pneg %p120
      %p127 = scmp.eq.s32.totalorder %s14, 7
      %p128 = por %p126, %p127
      %p129 = scmp.ne.s32.totalorder %s121, %s124
      %p130 = scmp.eq.s32.totalorder %s14, 0
      %p131 = por %p129, %p130
      %p132 = scmp.ne.s32.totalorder %s121, %s124
      %p133 = scmp.eq.s32.totalorder %s19, 7
      %p134 = por %p132, %p133
      %p135 = scmp.ne.s32.totalorder %s124, %s125
      %p136 = scmp.eq.s32.totalorder %s19, 0
      %p137 = por %p135, %p136
      %p138 = scmp.ne.s32.totalorder %s124, %s125
      %p139 = scmp.eq.s32.totalorder %s20, 7
      %p140 = por %p138, %p139
      %p142 = scmp.ne.s32.totalorder %s125, %s141
      %p143 = scmp.eq.s32.totalorder %s20, 0
      %p144 = por %p142, %p143
      %s146 = sadd.s32 %s145, 1
      %p149 = scmp.eq.s32.totalorder %s14, 7
      %p150 = scmp.ne.s32.totalorder %s145, %s147
      %p151 = scmp.eq.s32.totalorder %s14, 0
      %p152 = por %p150, %p151
      %p153 = scmp.ne.s32.totalorder %s145, %s147
      %p154 = scmp.eq.s32.totalorder %s19, 7
      %p155 = por %p153, %p154
      %p156 = scmp.ne.s32.totalorder %s147, %s148
      %p157 = scmp.eq.s32.totalorder %s19, 0
      %p158 = por %p156, %p157
      %p159 = scmp.ne.s32.totalorder %s147, %s148
      %p160 = scmp.eq.s32.totalorder %s20, 7
      %p161 = por %p159, %p160
      %p163 = scmp.ne.s32.totalorder %s148, %s162
      %p164 = scmp.eq.s32.totalorder %s20, 0
      %p165 = por %p163, %p164
      %s166 = ssub.s32 %s21, %s40
      %s167 = ssub.s32 %s22, %s36
      %s168 = sor.u32 %s166, %s167
      %p169 = scmp.eq.s32.totalorder %s168, 0
      %s171 = sadd.s32 %s170, 1
      %s172 = scalar_select %p169, %s170, %s171
      %p175 = pneg %p169
      %p176 = scmp.eq.s32.totalorder %s14, 7
      %p177 = por %p175, %p176
      %p178 = scmp.ne.s32.totalorder %s170, %s173
      %p179 = scmp.eq.s32.totalorder %s14, 0
      %p180 = por %p178, %p179
      %p181 = scmp.ne.s32.totalorder %s170, %s173
      %p182 = scmp.eq.s32.totalorder %s19, 7
      %p183 = por %p181, %p182
      %p184 = scmp.ne.s32.totalorder %s173, %s174
      %p185 = scmp.eq.s32.totalorder %s19, 0
      %p186 = por %p184, %p185
      %p187 = scmp.ne.s32.totalorder %s173, %s174
      %p188 = scmp.eq.s32.totalorder %s20, 7
      %p189 = por %p187, %p188
      %p191 = scmp.ne.s32.totalorder %s174, %s190
      %p192 = scmp.eq.s32.totalorder %s20, 0
      %p193 = por %p191, %p192
      %p194 = scmp.le.s32.totalorder 1, %s14
      %p195 = scmp.lt.s32.totalorder %s14, 9
      %p196 = pnand %p194, %p195
      %p197 = pneg %p196
      // Predicated region
      $region9: #{tpu_custom_call.1} parent=5 // pred_check
        _
      $region10: #{tpu_custom_call.1} parent=5 // pred_check_branch
        %199 = sbr.rel (%p196) target = $region12
      $region11: #{tpu_custom_call.1} parent=5 // pred_region
        %s200 = ssub.s32 %s14, 1
        // Predicated region
        $region13: #{tpu_custom_call.1} parent=11 // pred_check
          %p201 = pneg %p158
        $region14: #{tpu_custom_call.1} parent=11 // pred_check_branch
          %203 = sbr.rel (%p201) target = $region16
        $region15: #{tpu_custom_call.1} parent=11 // pred_region
          _
        $region16: #{tpu_custom_call.1} parent=11 // pred_fallthru
          _
      $region12: #{tpu_custom_call.1} parent=5 // pred_fallthru
        _
      %p204 = scmp.lt.s32.totalorder %s14, 8
      // Predicated region
      $region17: #{tpu_custom_call.1} parent=5 // pred_check
        %p205 = pneg %p204
      $region18: #{tpu_custom_call.1} parent=5 // pred_check_branch
        %207 = sbr.rel (%p205) target = $region20
      $region19: #{tpu_custom_call.1} parent=5 // pred_region
        // Predicated region
        $region21: #{tpu_custom_call.1} parent=19 // pred_check
          %p208 = pneg %p53
        $region22: #{tpu_custom_call.1} parent=19 // pred_check_branch
          %210 = sbr.rel (%p208) target = $region24
        $region23: #{tpu_custom_call.1} parent=19 // pred_region
          %p211 = scmp.lt.s32.totalorder %s21, 1
          %s212 = scalar_select %p211, %s21, 1
          %s213 = smul.addr %s212, 8
          %s214 = scalar_lea.vmem %s0, %s213
        $region24: #{tpu_custom_call.1} parent=19 // pred_fallthru
          _
        // Predicated region
        $region25: #{tpu_custom_call.1} parent=19 // pred_check
          %p215 = pneg %p79
        $region26: #{tpu_custom_call.1} parent=19 // pred_check_branch
          %217 = sbr.rel (%p215) target = $region28
        $region27: #{tpu_custom_call.1} parent=19 // pred_region
          %p218 = scmp.lt.s32.totalorder %s23, 3
          %s219 = scalar_select %p218, %s23, 3
          %s220 = smul.addr %s219, 4
          %s221 = smul.addr %s220, 8
          %s222 = scalar_lea.vmem %s1, %s221
        $region28: #{tpu_custom_call.1} parent=19 // pred_fallthru
          _
        // Predicated region
        $region29: #{tpu_custom_call.1} parent=19 // pred_check
          %p223 = pneg %p105
        $region30: #{tpu_custom_call.1} parent=19 // pred_check_branch
          %225 = sbr.rel (%p223) target = $region32
        $region31: #{tpu_custom_call.1} parent=19 // pred_region
          %p226 = scmp.lt.s32.totalorder %s23, 3
          %s227 = scalar_select %p226, %s23, 3
          %s228 = scalar_lea.vmem %s2, %s227
        $region32: #{tpu_custom_call.1} parent=19 // pred_fallthru
          _
        // Predicated region
        $region33: #{tpu_custom_call.1} parent=19 // pred_check
          %p229 = pneg %p131
        $region34: #{tpu_custom_call.1} parent=19 // pred_check_branch
          %231 = sbr.rel (%p229) target = $region36
        $region35: #{tpu_custom_call.1} parent=19 // pred_region
          %p232 = scmp.lt.s32.totalorder %s23, 3
          %s233 = scalar_select %p232, %s23, 3
          %s234 = smul.addr %s233, 8
          %s235 = scalar_lea.vmem %s3, %s234
        $region36: #{tpu_custom_call.1} parent=19 // pred_fallthru
          _
      $region20: #{tpu_custom_call.1} parent=5 // pred_fallthru
        _
      %p236 = scmp.le.s32.totalorder 1, %s14
      %p237 = scmp.lt.s32.totalorder %s14, 9
      %p238 = pnand %p236, %p237
      %p239 = pneg %p238
      // Predicated region
      $region37: #{tpu_custom_call.1} parent=5 // pred_check
        _
      $region38: #{tpu_custom_call.1} parent=5 // pred_check_branch
        %241 = sbr.rel (%p238) target = $region40
      $region39: #{tpu_custom_call.1} parent=5 // pred_region
        %s242 = ssub.s32 %s14, 1
        %p243 = scmp.lt.s32.totalorder %s24, 1
        %s244 = scalar_select %p243, %s24, 1
        %s245 = smul.addr %s244, 8
        %s246 = scalar_lea.vmem %s0, %s245
        %p247 = pneg %p59
        %p248 = pneg %p56
        %p249 = scmp.lt.s32.totalorder %s26, 3
        %s250 = scalar_select %p249, %s26, 3
        %s251 = smul.addr %s250, 4
        %s252 = smul.addr %s251, 8
        %s253 = scalar_lea.vmem %s1, %s252
        %p254 = pneg %p85
        %p255 = pneg %p82
        %p256 = scmp.lt.s32.totalorder %s26, 3
        %s257 = scalar_select %p256, %s26, 3
        %s258 = scalar_lea.vmem %s2, %s257
        %p259 = pneg %p111
        %p260 = pneg %p108
        %p261 = scmp.lt.s32.totalorder %s26, 3
        %s262 = scalar_select %p261, %s26, 3
        %s263 = smul.addr %s262, 8
        %s264 = scalar_lea.vmem %s3, %s263
        %p265 = pneg %p137
        %p266 = pneg %p134
        %p267 = pneg %p158
        %p268 = pneg %p155
        %p269 = pneg %p186
        %p270 = pneg %p183
        %s271 = sand.u32 %s173, 1
        %s272 = scalar_lea.sflag [#allocation4], %s271
        %s273 = sand.u32 %s173, 1
        %s274 = smul.addr %s273, 8
        %s275 = scalar_lea.vmem [#allocation3], %s274
        %p276 = scmp.lt.s32.totalorder %s24, 1
        %s277 = scalar_select %p276, %s24, 1
        %s278 = smul.addr %s277, 8
        %s279 = scalar_lea.vmem %s0, %s278
        %p280 = scmp.lt.s32.totalorder %s26, 3
        %s281 = scalar_select %p280, %s26, 3
        %s282 = smul.addr %s281, 4
        %s283 = smul.addr %s282, 8
        %s284 = scalar_lea.vmem %s1, %s283
        %p285 = scmp.lt.s32.totalorder %s26, 3
        %s286 = scalar_select %p285, %s26, 3
        %s287 = scalar_lea.vmem %s2, %s286
        %p288 = scmp.lt.s32.totalorder %s26, 3
        %s289 = scalar_select %p288, %s26, 3
        %s290 = smul.addr %s289, 8
        %s291 = scalar_lea.vmem %s3, %s290
        %p292 = scmp.eq.s32.totalorder %s26, 0
        // Predicated region
        $region41: #{tpu_custom_call.1} parent=39 // pred_check
          %p293 = pneg %p292
        $region42: #{tpu_custom_call.1} parent=39 // pred_check_branch
          %295 = sbr.rel (%p293) target = $region44
        $region43: #{tpu_custom_call.1} parent=39 // pred_region
          %vm296 = vcmask 261120
          %297 = vst.msk [vmem:[#allocation2] sm:$0xff] %vm296, 0.0
        $region44: #{tpu_custom_call.1} parent=39 // pred_fallthru
          _
        %v298 = vld [vmem:[%s279] sm:$0xff]
        %v299 = vld [vmem:[%s284] sm:$0xff]
        %v300 = vld [vmem:[%s284 + $0x8] sm:$0xff]
        %v301 = vld [vmem:[%s284 + $0x10] sm:$0xff]
        %v302 = vld [vmem:[%s284 + $0x18] sm:$0xff]
        %v303 = vld [vmem:[%s287] sm:$0x1]
        %v305 = vperm.slane %v303, 0
        %vm307 = vcmask 261120
        %v309 = vsel %vm307, %v298, 0
        %311 = vmatpush.msra.mxu0 0.0
        %312 = vmatpush.msra.mxu0 0.0
        %313 = vmatpush.msra.mxu0 0.0
        %314 = vmatpush.msra.mxu0 0.0
        %315 = vmatpush.msra.mxu0 0.0
        %316 = vmatpush.msra.mxu0 0.0
        %317 = vmatpush.msra.mxu0 0.0
        %318 = vmatpush.msra.mxu0 0.0
        %319 = vmatpush.msra.mxu0 0.0
        %320 = vmatpush.msra.mxu0 0.0
        %321 = vmatpush.msra.mxu0 0.0
        %322 = vmatpush.msra.mxu0 0.0
        %323 = vmatpush.msra.mxu0 %v302
        %324 = vmatpush.msra.mxu0 %v301
        %325 = vmatpush.msra.mxu0 %v300
        %326 = vmatpush.msra.mxu0 %v299
        %327 = vmatmul.f32.gmra.mxu0 %v309
        %v328 = vpop.f32.mrf.mxu0
        %v329 = vadd.f32 %v305, %v328
        %330 = vdwg.mxu0
        %332 = vrot.lane.b32.xlu0 %v329, 120
        %v333 = vpop.permute.xlu0 %332
        %vm334 = vcmask 64512
        %v335 = vsel %vm334, %v329, 0
        %v337 = vsel %vm334, %v333, 0
        %339 = vmatpush.xpose.msra.mxu0 0.0
        %340 = vmatpush.xpose.msra.mxu0 0.0
        %341 = vmatpush.xpose.msra.mxu0 0.0
        %342 = vmatpush.xpose.msra.mxu0 0.0
        %343 = vmatpush.xpose.msra.mxu0 0.0
        %344 = vmatpush.xpose.msra.mxu0 0.0
        %345 = vmatpush.xpose.msra.mxu0 0.0
        %346 = vmatpush.xpose.msra.mxu0 0.0
        %347 = vmatpush.xpose.msra.mxu0 0.0
        %348 = vmatpush.xpose.msra.mxu0 0.0
        %349 = vmatpush.xpose.msra.mxu0 0.0
        %350 = vmatpush.xpose.msra.mxu0 0.0
        %351 = vmatpush.xpose.msra.mxu0 0.0
        %352 = vmatpush.xpose.msra.mxu0 0.0
        %353 = vmatpush.xpose.msra.mxu0 0.0
        %354 = vmatpush.xpose.msra.mxu0 %v337
        %355 = vmatmul.f32.gmra.mxu0 %v335
        %v356 = vpop.f32.mrf.mxu0
        %v357 = vadd.f32 0.0, %v356
        %358 = vdwg.mxu0
        %v359 = vsel %vm334, %v357, -inf
        %360 = vmax.xlane.f32.xlu0 %v359
        %v361 = vpop.xlane.xlu0 %360
        %v362 = vsub.f32 %v357, %v361
        %v363 = vmul.f32 %v362, 1.442695
        %v364 = vpow.pop %v363
        %v365 = vsel %vm334, %v364, 0.0
        %366 = vadd.xlane.f32.xlu0 %v365
        %v367 = vpop.xlane.xlu0 %366
        %v368 = vrcp.pop %v367
        %v369 = vmul.f32 %v364, %v368
        %370 = vrot.lane.b32.xlu0 %v329, 112
        %v371 = vpop.permute.xlu0 %370
        %v374 = vsel %vm334, %v369, 0
        %376 = vmatpush.msra.mxu0 0.0
        %377 = vmatpush.msra.mxu0 0.0
        %378 = vmatpush.msra.mxu0 0.0
        %379 = vmatpush.msra.mxu0 0.0
        %380 = vmatpush.msra.mxu0 0.0
        %381 = vmatpush.msra.mxu0 0.0
        %382 = vmatpush.msra.mxu0 0.0
        %383 = vmatpush.msra.mxu0 0.0
        %384 = vmatpush.msra.mxu0 0.0
        %385 = vmatpush.msra.mxu0 0.0
        %386 = vmatpush.msra.mxu0 0.0
        %387 = vmatpush.msra.mxu0 0.0
        %388 = vmatpush.msra.mxu0 0.0
        %389 = vmatpush.msra.mxu0 0.0
        %390 = vmatpush.msra.mxu0 0.0
        %391 = vmatpush.msra.mxu0 %v371
        %392 = vmatmul.f32.gmra.mxu0 %v374
        %v393 = vpop.f32.mrf.mxu0
        %v394 = vadd.f32 0.0, %v393
        %395 = vdwg.mxu0
        %v396 = vld [vmem:[#allocation2] sm:$0xff]
        %v397 = vld [vmem:[%s291] sm:$0xff]
        %v399 = vsel %vm334, %v394, 0
        %401 = vmatpush.msra.mxu0 0.0
        %402 = vmatpush.msra.mxu0 0.0
        %403 = vmatpush.msra.mxu0 0.0
        %404 = vmatpush.msra.mxu0 0.0
        %405 = vmatpush.msra.mxu0 0.0
        %406 = vmatpush.msra.mxu0 0.0
        %407 = vmatpush.msra.mxu0 0.0
        %408 = vmatpush.msra.mxu0 0.0
        %409 = vmatpush.msra.mxu0 0.0
        %410 = vmatpush.msra.mxu0 0.0
        %411 = vmatpush.msra.mxu0 0.0
        %412 = vmatpush.msra.mxu0 0.0
        %413 = vmatpush.msra.mxu0 0.0
        %414 = vmatpush.msra.mxu0 0.0
        %415 = vmatpush.msra.mxu0 0.0
        %416 = vmatpush.msra.mxu0 %v397
        %417 = vmatmul.f32.gmra.mxu0 %v399
        %v418 = vpop.f32.mrf.mxu0
        %v419 = vadd.f32 0.0, %v418
        %420 = vdwg.mxu0
        %v421 = vadd.f32 %v396, %v419
        %422 = vst.msk [vmem:[#allocation2] sm:$0xff] %vm307, %v421
        %p423 = scmp.eq.s32.totalorder %s26, 3
        // Predicated region
        $region45: #{tpu_custom_call.1} parent=39 // pred_check
          %p424 = pneg %p423
        $region46: #{tpu_custom_call.1} parent=39 // pred_check_branch
          %426 = sbr.rel (%p424) target = $region48
        $region47: #{tpu_custom_call.1} parent=39 // pred_region
          %v427 = vld [vmem:[#allocation2] sm:$0xff]
          %v428 = vld [vmem:[%s4] sm:$0x1]
          %v430 = vperm.slane %v428, 0
          %v432 = vadd.f32 %v427, %v430
          %433 = vst.msk [vmem:[%s275] sm:$0xff] %vm307, %v432
        $region48: #{tpu_custom_call.1} parent=39 // pred_fallthru
          _
        %s434 = sand.u32 %s173, 1
        %s435 = scalar_lea.sflag [#allocation4], %s434
        %s436 = sand.u32 %s173, 1
        %s437 = smul.addr %s436, 8
        %s438 = scalar_lea.vmem [#allocation3], %s437
        // Predicated region
        $region49: #{tpu_custom_call.1} parent=39 // pred_check
          %p439 = pneg %p183
        $region50: #{tpu_custom_call.1} parent=39 // pred_check_branch
          %441 = sbr.rel (%p439) target = $region52
        $region51: #{tpu_custom_call.1} parent=39 // pred_region
          %443 = vsyncadd %s435, 0
          %s444 = sadd.s32 %s25, %s24
          %s445 = smul.addr %s444, 8
          %s446 = scalar_lea.hbm %s5, %s445
          %s448 = sshll.u32 %s438, 4
          %s449 = int_to_ptr.vmem [resolvable:$true] %s448
          %s450 = sshll.u32 %s446, 4
          %s451 = int_to_ptr.hbm [resolvable:$true] %s450
          %453 = dma.vmem_to_hbm [thread:$0]  %s449, 128, %s451, %s435
        $region52: #{tpu_custom_call.1} parent=39 // pred_fallthru
          _
      $region40: #{tpu_custom_call.1} parent=5 // pred_fallthru
        _
      %p454 = scmp.le.s32.totalorder 2, %s14
      // Predicated region
      $region53: #{tpu_custom_call.1} parent=5 // pred_check
        %p455 = pneg %p454
      $region54: #{tpu_custom_call.1} parent=5 // pred_check_branch
        %457 = sbr.rel (%p455) target = $region56
      $region55: #{tpu_custom_call.1} parent=5 // pred_region
        %s458 = ssub.s32 %s14, 2
        // Predicated region
        $region57: #{tpu_custom_call.1} parent=55 // pred_check
          %p459 = pneg %p189
        $region58: #{tpu_custom_call.1} parent=55 // pred_check_branch
          %461 = sbr.rel (%p459) target = $region60
        $region59: #{tpu_custom_call.1} parent=55 // pred_region
          %s462 = sand.u32 %s174, 1
          %s463 = scalar_lea.sflag [#allocation4], %s462
          %s464 = sand.u32 %s174, 1
          %s465 = smul.addr %s464, 8
          %s466 = scalar_lea.vmem [#allocation3], %s465
          %468 = dma.done %s463, 128
        $region60: #{tpu_custom_call.1} parent=55 // pred_fallthru
          _
      $region56: #{tpu_custom_call.1} parent=5 // pred_fallthru
        _
    $region6: #{tpu_custom_call.1} parent=1 // loop_footer
      %s18 = sadd.s32 1, %s14
    $region7: #{tpu_custom_call.1} parent=1 // loop_footer_branch
      %13 = sbr.rel target = $region3
    $region8: #{tpu_custom_call.1} parent=1 // loop_exit
      _
    %469 = vsyncpa [#allocation4], 1
    %s470 = scalar_lea.sflag [#allocation4], 1
    %471 = vsyncpa %s470, 1

</llo_original>
